<compile_context>
chip_gen: v6e
topology: v6e:2x2x1
jax: 0.10.0
libtpu: 0.0.40
codegen_flags: <defaults>
</compile_context>

<pallas_src>
import functools

import jax
import jax.numpy as jnp
from jax.experimental import pallas as pl
from jax.experimental.pallas import tpu as pltpu

EPS = 1e-5  # nn.BatchNorm2d default eps


# --------------------------------------------------------------------------
# Generation-aware limits (VMEM budget + max lane-tile width).
# --------------------------------------------------------------------------
def _gen_limits():
    try:
        kind = jax.devices()[0].device_kind.lower()
    except Exception:  # pragma: no cover
        kind = ""
    if "v7" in kind:                       # 64 MiB physical VMEM per TensorCore
        return 48 * 1024 * 1024, 2048
    if "v5" in kind or "v6" in kind:       # 128 MiB VMEM
        return 96 * 1024 * 1024, 8192
    return 32 * 1024 * 1024, 2048          # conservative default for unknown chips


# --------------------------------------------------------------------------
# Kernels.
#
# mode == "plain": conv -> bn -> [relu]
# mode == "ident": conv -> bn -> + identity residual -> relu
# mode == "fold" : block-diagonal (main 3x3 | 1x1 shortcut) conv -> bn(both) ->
#                  add the two normalized halves -> relu
# --------------------------------------------------------------------------
def _conv_bn_fused_kernel(*refs, inv_m, relu, mode, cout):
    """Fully-resident single pass: conv + batch stats + normalize (+epilogue)."""
    if mode == "ident":
        p_ref, w_ref, g_ref, b_ref, r_ref, o_ref = refs
    else:
        p_ref, w_ref, g_ref, b_ref, o_ref = refs

    # (C_all, K)bf16 @ (K, M)bf16 -> (C_all, M)f32 on the MXU (lane-dense output).
    y = jnp.dot(w_ref[...], p_ref[...], preferred_element_type=jnp.float32)
    s = jnp.sum(y, axis=1, keepdims=True)
    q = jnp.sum(y * y, axis=1, keepdims=True)
    mean = s * inv_m
    var = q * inv_m - mean * mean          # biased batch variance
    scale = jax.lax.rsqrt(var + EPS) * g_ref[...]
    out = (y - mean) * scale + b_ref[...]
    if mode == "ident":
        out = out + r_ref[...].astype(jnp.float32)
    elif mode == "fold":
        out = out[:cout] + out[cout:]      # main branch + normalized 1x1 shortcut
    if relu:
        out = jnp.maximum(out, 0.0)
    o_ref[...] = out.astype(o_ref.dtype)


def _conv_stats_kernel(p_ref, w_ref, y_ref, s_ref, q_ref):
    """Tiled pass 1: stream patches once, emit y (bf16) + accumulate sum / sumsq."""
    y = jnp.dot(w_ref[...], p_ref[...], preferred_element_type=jnp.float32)

    @pl.when(pl.program_id(0) == 0)
    def _init():
        s_ref[...] = jnp.zeros_like(s_ref)
        q_ref[...] = jnp.zeros_like(q_ref)

    s_ref[...] += jnp.sum(y, axis=1, keepdims=True)
    q_ref[...] += jnp.sum(y * y, axis=1, keepdims=True)
    y_ref[...] = y.astype(y_ref.dtype)


def _bn_apply_kernel(*refs, inv_m, relu, mode, cout):
    """Tiled pass 2 ("parallel" over M): normalize + affine + residual/fold + relu."""
    if mode == "ident":
        y_ref, s_ref, q_ref, g_ref, b_ref, r_ref, o_ref = refs
    else:
        y_ref, s_ref, q_ref, g_ref, b_ref, o_ref = refs
    y = y_ref[...].astype(jnp.float32)
    mean = s_ref[...] * inv_m
    var = q_ref[...] * inv_m - mean * mean
    scale = jax.lax.rsqrt(var + EPS) * g_ref[...]
    out = (y - mean) * scale + b_ref[...]
    if mode == "ident":
        out = out + r_ref[...].astype(jnp.float32)
    elif mode == "fold":
        out = out[:cout] + out[cout:]
    if relu:
        out = jnp.maximum(out, 0.0)
    o_ref[...] = out.astype(o_ref.dtype)


# --------------------------------------------------------------------------
# conv + BN(+residual / fused shortcut) + ReLU wrapper.
# --------------------------------------------------------------------------
def conv_bn(patches, w, g, b, *, m_real, relu=True, residual=None, fold=False,
            tile_cap=None, vmem_limit=None):
    """patches: (K, M_pad) bf16, w: (C_all, K) bf16, g/b: (C_all, 1) f32.

    Returns (C_out, M_pad') bf16 where C_out = C_all // 2 when fold=True.
    Batch statistics are computed over the first m_real columns (padded columns are
    exact zeros from zero patch columns, so they contribute nothing to sum / sumsq).
    """
    assert not (fold and residual is not None)
    k, m_pad = patches.shape
    c_all = w.shape[0]
    c_out = c_all // 2 if fold else c_all
    mode = "ident" if residual is not None else ("fold" if fold else "plain")

    auto_vmem, auto_cap = _gen_limits()
    vmem_limit = vmem_limit or auto_vmem
    tile_cap = tile_cap or auto_cap
    tile_cap = max(128, (tile_cap // 128) * 128)     # keep tiles lane-dense
    inv_m = 1.0 / float(m_real)

    # ---- small/medium M: fully-resident single-pass call (no recompute) -------------
    if m_pad <= tile_cap:
        args = [patches, w, g, b]
        if residual is not None:
            args.append(residual)
        kern = functools.partial(_conv_bn_fused_kernel, inv_m=inv_m, relu=relu,
                                 mode=mode, cout=c_out)
        return pl.pallas_call(
            kern,
            out_shape=jax.ShapeDtypeStruct((c_out, m_pad), jnp.bfloat16),
            in_specs=[pl.BlockSpec(memory_space=pltpu.MemorySpace.VMEM)] * len(args),
            out_specs=pl.BlockSpec(memory_space=pltpu.MemorySpace.VMEM),
            compiler_params=pltpu.CompilerParams(vmem_limit_bytes=vmem_limit),
        )(*args)

    # ---- large M: stats call (arbitrary) + normalize call (parallel) ----------------
    tm = tile_cap
    m_t = -(-m_pad // tm) * tm                       # pad M up to a multiple of tm
    if m_t != m_pad:
        patches = jnp.pad(patches, ((0, 0), (0, m_t - m_pad)))
        if residual is not None:
            residual = jnp.pad(residual, ((0, 0), (0, m_t - m_pad)))
        m_pad = m_t
    n_tiles = m_pad // tm

    y, ssum, ssq = pl.pallas_call(
        _conv_stats_kernel,
        grid=(n_tiles,),
        out_shape=(jax.ShapeDtypeStruct((c_all, m_pad), jnp.bfloat16),
                   jax.ShapeDtypeStruct((c_all, 1), jnp.float32),
                   jax.ShapeDtypeStruct((c_all, 1), jnp.float32)),
        in_specs=[pl.BlockSpec((k, tm), lambda i: (0, i)),
                  pl.BlockSpec((c_all, k), lambda i: (0, 0))],
        out_specs=(pl.BlockSpec((c_all, tm), lambda i: (0, i)),
                   pl.BlockSpec((c_all, 1), lambda i: (0, 0)),
                   pl.BlockSpec((c_all, 1), lambda i: (0, 0))),
        compiler_params=pltpu.CompilerParams(
            dimension_semantics=("arbitrary",),      # stats accumulate across M tiles
            vmem_limit_bytes=vmem_limit),
    )(patches, w)

    args = [y, ssum, ssq, g, b]
    in_specs = [pl.BlockSpec((c_all, tm), lambda i: (0, i)),
                pl.BlockSpec((c_all, 1), lambda i: (0, 0)),
                pl.BlockSpec((c_all, 1), lambda i: (0, 0)),
                pl.BlockSpec((c_all, 1), lambda i: (0, 0)),
                pl.BlockSpec((c_all, 1), lambda i: (0, 0))]
    if residual is not None:
        args.append(residual)
        in_specs.append(pl.BlockSpec((c_out, tm), lambda i: (0, i)))
    kern = functools.partial(_bn_apply_kernel, inv_m=inv_m, relu=relu,
                             mode=mode, cout=c_out)
    return pl.pallas_call(
        kern,
        grid=(n_tiles,),
        out_shape=jax.ShapeDtypeStruct((c_out, m_pad), jnp.bfloat16),
        in_specs=in_specs,
        out_specs=pl.BlockSpec((c_out, tm), lambda i: (0, i)),
        compiler_params=pltpu.CompilerParams(
            dimension_semantics=("parallel",),       # independent tiles -> v7x megacore
            vmem_limit_bytes=vmem_limit),
    )(*args)


def conv_bn_nchw(patches, w, g, b, out_shape_cf, **kwargs):
    """conv_bn + slice off padded columns + reshape back to (C, N, Ho, Wo)."""
    c, n, ho, wo = out_shape_cf
    m_real = n * ho * wo
    out = conv_bn(patches, w, g, b, m_real=m_real, **kwargs)
    return out[:, :m_real].reshape(c, n, ho, wo)


# --------------------------------------------------------------------------
# Global average pool (pooling matrix matmul) + Linear.
# TODO(synk): fold this tiny pool+linear into the epilogue of the last conv_bn call to
# drop one launch and the HBM round trip of the final feature map.
# --------------------------------------------------------------------------
def _pool_linear_kernel(f_ref, pm_ref, w_ref, b_ref, o_ref):
    pooled = jnp.dot(f_ref[...], pm_ref[...], preferred_element_type=jnp.float32)   # (C, N)
    o_ref[...] = (jnp.dot(w_ref[...].astype(jnp.float32), pooled,
                          preferred_element_type=jnp.float32) + b_ref[...])


def pool_linear(feat, pool_mat, fc_w, fc_b):
    ncls = fc_w.shape[0]
    n = pool_mat.shape[1]
    args = [feat, pool_mat, fc_w, fc_b]
    return pl.pallas_call(
        _pool_linear_kernel,
        out_shape=jax.ShapeDtypeStruct((ncls, n), jnp.float32),
        in_specs=[pl.BlockSpec(memory_space=pltpu.MemorySpace.VMEM) for _ in args],
        out_specs=pl.BlockSpec(memory_space=pltpu.MemorySpace.VMEM),
    )(*args)


# --------------------------------------------------------------------------
# Plain-JAX glue: channels-first tap extraction (lane-dense (K, M_pad) patches).
# --------------------------------------------------------------------------
def extract_taps(x_cf, kh, kw, stride, pad):
    """x_cf: (C, N, H, W) -> ((K16, M128) bf16, Ho, Wo); K=(tap,ci) order, M=(n,y,x)."""
    c, n, h, w = x_cf.shape
    xp = jnp.pad(x_cf, ((0, 0), (0, 0), (pad, pad), (pad, pad)))
    ho = (h + 2 * pad - kh) // stride + 1
    wo = (w + 2 * pad - kw) // stride + 1
    taps = []
    for ky in range(kh):
        for kx in range(kw):
            taps.append(xp[:, :, ky:ky + stride * ho:stride, kx:kx + stride * wo:stride])
    p = jnp.stack(taps, axis=0).reshape(kh * kw * c, n * ho * wo)
    k = kh * kw * c
    k16 = -(-k // 16) * 16                          # bf16 sublane packing: pad K to 16
    if k16 != k:
        p = jnp.pad(p, ((0, k16 - k), (0, 0)))
    m = n * ho * wo
    m128 = -(-m // 128) * 128                       # lane-dense M
    if m128 != m:
        p = jnp.pad(p, ((0, 0), (0, m128 - m)))
    # TODO(synk): this im2col still materializes duplicated patches in HBM; fusing tap
    # extraction into the kernel (shifted matmuls on a haloed tile) would remove it.
    return p.astype(jnp.bfloat16), ho, wo


def _pad_cols(a, m_target):
    if a.shape[1] == m_target:
        return a
    return jnp.pad(a, ((0, 0), (0, m_target - a.shape[1])))


# --------------------------------------------------------------------------
# Deterministic parameter construction (kaiming_normal_ for conv / linear weights).
# --------------------------------------------------------------------------
def _kaiming_conv(key, cout, cin, kh, kw):
    fan_in = cin * kh * kw
    std = (2.0 / fan_in) ** 0.5
    w = jax.random.normal(key, (cout, kh, kw, cin), jnp.float32) * std
    w = w.reshape(cout, fan_in)
    k16 = -(-fan_in // 16) * 16
    if k16 != fan_in:
        w = jnp.pad(w, ((0, 0), (0, k16 - fan_in)))
    return w.astype(jnp.bfloat16)                   # (Cout, K16), matches patch K order


def _stack_block_diag(w_main, w_sc):
    cm, km = w_main.shape
    cs, ks = w_sc.shape
    top = jnp.concatenate([w_main, jnp.zeros((cm, ks), w_main.dtype)], axis=1)
    bot = jnp.concatenate([jnp.zeros((cs, km), w_sc.dtype), w_sc], axis=1)
    return jnp.concatenate([top, bot], axis=0)      # (cm+cs, km+ks)


def init_resnet_params(key, num_blocks=(1, 1, 1), num_classes=10):
    keys = iter(jax.random.split(key, 128))
    params = {}
    params["stem_w"] = _kaiming_conv(next(keys), 16, 3, 3, 3)
    params["stem_g"] = jnp.ones((16, 1), jnp.float32)
    params["stem_b"] = jnp.zeros((16, 1), jnp.float32)

    blocks = []
    in_planes = 16
    for planes, nb, stride in ((16, num_blocks[0], 1),
                               (32, num_blocks[1], 2),
                               (64, num_blocks[2], 2)):
        for s in [stride] + [1] * (nb - 1):
            bp = {
                "w1": _kaiming_conv(next(keys), planes, in_planes, 3, 3),
                "g1": jnp.ones((planes, 1), jnp.float32),
                "b1": jnp.zeros((planes, 1), jnp.float32),
            }
            w2 = _kaiming_conv(next(keys), planes, planes, 3, 3)
            g2 = jnp.ones((planes, 1), jnp.float32)
            b2 = jnp.zeros((planes, 1), jnp.float32)
            if s != 1 or in_planes != planes:
                ws = _kaiming_conv(next(keys), planes, in_planes, 1, 1)
                gs = jnp.ones((planes, 1), jnp.float32)
                bs = jnp.zeros((planes, 1), jnp.float32)
                # Block-diagonal fusion of main 3x3 conv and 1x1 downsample shortcut.
                bp["w2s"] = _stack_block_diag(w2, ws)            # (2*planes, K2+Ks)
                bp["g2s"] = jnp.concatenate([g2, gs], axis=0)
                bp["b2s"] = jnp.concatenate([b2, bs], axis=0)
            else:
                bp["w2"], bp["g2"], bp["b2"] = w2, g2, b2
            blocks.append((bp, in_planes, planes, s))
            in_planes = planes
    params["blocks"] = blocks

    std = (2.0 / 64.0) ** 0.5                        # kaiming fan_in = 64 for the Linear
    params["fc_w"] = (jax.random.normal(next(keys), (num_classes, 64), jnp.float32)
                      * std).astype(jnp.bfloat16)
    # TODO(synk): PyTorch Linear bias default is uniform; zeros kept for determinism.
    params["fc_b"] = jnp.zeros((num_classes, 1), jnp.float32)
    return params


# --------------------------------------------------------------------------
# Forward pass (mirrors _Resnet.forward with Option-B BasicBlock, expansion=1).
# --------------------------------------------------------------------------
def basic_block(x_cf, bp, in_planes, planes, stride, tile_cap=None):
    """x_cf: (Cin, N, H, W) bf16 -> (planes, N, Ho, Wo) bf16."""
    cin, n, h, w = x_cf.shape
    # conv1 3x3 (stride) -> bn1 -> relu
    p1, ho, wo = extract_taps(x_cf, 3, 3, stride, 1)
    h1 = conv_bn_nchw(p1, bp["w1"], bp["g1"], bp["b1"], (planes, n, ho, wo),
                      relu=True, tile_cap=tile_cap)
    # conv2 3x3 -> bn2 -> (+shortcut) -> relu
    p2, _, _ = extract_taps(h1, 3, 3, 1, 1)
    if stride != 1 or in_planes != planes:
        # Fused block-diagonal matmul: [3x3 main | 1x1 shortcut] in one kernel.
        ps, _, _ = extract_taps(x_cf, 1, 1, stride, 0)
        pcat = jnp.concatenate([p2, ps], axis=0)
        return conv_bn_nchw(pcat, bp["w2s"], bp["g2s"], bp["b2s"], (planes, n, ho, wo),
                            relu=True, fold=True, tile_cap=tile_cap)
    res = _pad_cols(x_cf.astype(jnp.bfloat16).reshape(planes, n * h * w), p2.shape[1])
    return conv_bn_nchw(p2, bp["w2"], bp["g2"], bp["b2"], (planes, n, ho, wo),
                        relu=True, residual=res, tile_cap=tile_cap)


def resnet_forward(params, x_nchw, tile_cap=None):
    n = x_nchw.shape[0]
    x_cf = jnp.transpose(x_nchw.astype(jnp.float32), (1, 0, 2, 3))   # (C, N, H, W)
    # stem: conv1 -> bn1 -> relu
    p, ho, wo = extract_taps(x_cf, 3, 3, 1, 1)
    h_ = conv_bn_nchw(p, params["stem_w"], params["stem_g"], params["stem_b"],
                      (16, n, ho, wo), relu=True, tile_cap=tile_cap)
    # layer1 / layer2 / layer3
    for bp, cin, cout, s in params["blocks"]:
        h_ = basic_block(h_, bp, cin, cout, s, tile_cap=tile_cap)
    # global average pool over the full spatial extent + linear
    c, n_, hf, wf = h_.shape
    feat = h_.reshape(c, n_ * hf * wf)
    pool_mat = jnp.repeat(jnp.eye(n_, dtype=jnp.float32) / float(hf * wf),
                          hf * wf, axis=0).astype(jnp.bfloat16)      # (N*Hf*Wf, N)
    logits_t = pool_linear(feat, pool_mat, params["fc_w"], params["fc_b"])  # (ncls, N)
    return jnp.transpose(logits_t)                                   # (N, num_classes)


if __name__ == "__main__":
    key = jax.random.PRNGKey(0)
    pkey, xkey = jax.random.split(key)
    params = init_resnet_params(pkey, num_blocks=(1, 1, 1), num_classes=10)
    # small CIFAR-like input: batch=2, 3 channels, 16x16 spatial (NCHW like PyTorch)
    x = jax.random.normal(xkey, (2, 3, 16, 16), jnp.float32)

    out = jax.block_until_ready(resnet_forward(params, x))
    assert out.shape == (2, 10) and out.dtype == jnp.float32

    # Also exercise the tiled path (stats pallas_call + "parallel" normalize pallas_call)
    # by forcing a small tile cap; it must agree with the fully-resident single-pass path.
    out_tiled = jax.block_until_ready(resnet_forward(params, x, tile_cap=128))
    assert float(jnp.max(jnp.abs(out_tiled - out))) < 0.25

    print("KERNEL_OK")
</pallas_src>

<mosaic_0001>
module attributes {stable_mosaic.version = 11 : i64} {
  func.func @_conv_bn_fused_kernel(%arg0: memref<32x512xbf16, #tpu.memory_space<vmem>>, %arg1: memref<16x32xbf16, #tpu.memory_space<vmem>>, %arg2: memref<16x1xf32, #tpu.memory_space<vmem>>, %arg3: memref<16x1xf32, #tpu.memory_space<vmem>>, %arg4: memref<16x512xbf16, #tpu.memory_space<vmem>>) attributes {dimension_semantics = [], scalar_prefetch = 0 : i64, scratch_operands = 0 : i64, tpu.core_type = #tpu.core_type<tc>} {
    %c0 = arith.constant 0 : index
    %c0_0 = arith.constant 0 : index
    %0 = vector.load %arg1[%c0, %c0_0] : memref<16x32xbf16, #tpu.memory_space<vmem>>, vector<16x32xbf16>
    %c0_1 = arith.constant 0 : index
    %c0_2 = arith.constant 0 : index
    %1 = vector.load %arg0[%c0_1, %c0_2] : memref<32x512xbf16, #tpu.memory_space<vmem>>, vector<32x512xbf16>
    %cst = arith.constant dense<0.000000e+00> : vector<16x512xf32>
    %2 = tpu.matmul %0, %1, %cst {dimension_numbers = #tpu.dot_dimension_numbers<[1], [0], [0], [1], [0, 0, 1, 1], [], []>} : vector<16x32xbf16>, vector<32x512xbf16>, vector<16x512xf32> -> vector<16x512xf32>
    %cst_3 = arith.constant dense<0.000000e+00> : vector<16xf32>
    %3 = vector.multi_reduction <add>, %2, %cst_3 [1] : vector<16x512xf32> to vector<16xf32>
    %4 = vector.shape_cast %3 : vector<16xf32> to vector<16x1xf32>
    %5 = arith.mulf %2, %2 : vector<16x512xf32>
    %cst_4 = arith.constant dense<0.000000e+00> : vector<16xf32>
    %6 = vector.multi_reduction <add>, %5, %cst_4 [1] : vector<16x512xf32> to vector<16xf32>
    %7 = vector.shape_cast %6 : vector<16xf32> to vector<16x1xf32>
    %cst_5 = arith.constant 0.001953125 : f32
    %8 = vector.broadcast %cst_5 : f32 to vector<16x1xf32>
    %9 = arith.mulf %4, %8 : vector<16x1xf32>
    %cst_6 = arith.constant 0.001953125 : f32
    %10 = vector.broadcast %cst_6 : f32 to vector<16x1xf32>
    %11 = arith.mulf %7, %10 : vector<16x1xf32>
    %12 = arith.mulf %9, %9 : vector<16x1xf32>
    %13 = arith.subf %11, %12 : vector<16x1xf32>
    %cst_7 = arith.constant 9.99999974E-6 : f32
    %14 = vector.broadcast %cst_7 : f32 to vector<16x1xf32>
    %15 = arith.addf %13, %14 : vector<16x1xf32>
    %16 = math.rsqrt %15 : vector<16x1xf32>
    %c0_8 = arith.constant 0 : index
    %c0_9 = arith.constant 0 : index
    %17 = vector.load %arg2[%c0_8, %c0_9] : memref<16x1xf32, #tpu.memory_space<vmem>>, vector<16x1xf32>
    %18 = arith.mulf %16, %17 : vector<16x1xf32>
    %19 = vector.broadcast %9 : vector<16x1xf32> to vector<16x512xf32>
    %20 = arith.subf %2, %19 : vector<16x512xf32>
    %21 = vector.broadcast %18 : vector<16x1xf32> to vector<16x512xf32>
    %22 = arith.mulf %20, %21 : vector<16x512xf32>
    %c0_10 = arith.constant 0 : index
    %c0_11 = arith.constant 0 : index
    %23 = vector.load %arg3[%c0_10, %c0_11] : memref<16x1xf32, #tpu.memory_space<vmem>>, vector<16x1xf32>
    %24 = vector.broadcast %23 : vector<16x1xf32> to vector<16x512xf32>
    %25 = arith.addf %22, %24 : vector<16x512xf32>
    %cst_12 = arith.constant 0.000000e+00 : f32
    %26 = vector.broadcast %cst_12 : f32 to vector<16x512xf32>
    %27 = arith.maximumf %25, %26 : vector<16x512xf32>
    %28 = arith.truncf %27 : vector<16x512xf32> to vector<16x512xbf16>
    %c0_13 = arith.constant 0 : index
    %c0_14 = arith.constant 0 : index
    %29 = vector.load %arg4[%c0_13, %c0_14] : memref<16x512xbf16, #tpu.memory_space<vmem>>, vector<16x512xbf16>
    tpu.vector_store %arg4[%c0_13, %c0_14], %28 {strides = array<i32>} : memref<16x512xbf16, #tpu.memory_space<vmem>>, vector<16x512xbf16>,
    return
  }
}

</mosaic_0001>

<llo_original>
// kernel: tpu_custom_call.1
$region0: #{tpu_custom_call.1}
  #allocation0 [shape = 'u32[]', space=smem, size = 0x4, offset = 0x4, fixed_abs, tag = 'smem constant byte address 0x4 - core index']
  #allocation1 [shape = 'u32[144,128]{1,0:T(1,128)}', space=vmem, size = 0x12000, scoped, tag = 'internal scratch']
  %s0 = inlined_call_operand.hbm [shape: bf16[32,512], index: 0, kind: input, shape index: {}]
  %s1 = inlined_call_operand.vmem [shape: bf16[16,32], index: 1, kind: input, shape index: {}]
  %s2 = inlined_call_operand.vmem [shape: f32[16,1], index: 2, kind: input, shape index: {}]
  %s3 = inlined_call_operand.vmem [shape: f32[16,1], index: 3, kind: input, shape index: {}]
  %s4 = inlined_call_operand.hbm [shape: bf16[16,512], index: 4, kind: output, shape index: {}]
  %s5 = sld [smem:[#allocation0]]
  $region30: #{tpu_custom_call.1} parent=0
    _
  %s7 = ssub.s32 1, %s5
  %s8 = scalar_select 0, %s7, %s5
  $region1: #{tpu_custom_call.1} parent=0
    #allocation2 [shape = 'u8[32768]{0}', space=vmem, size = 0x8000, scoped, tag = 'input window, operand 0, single buffered']
    #allocation3 [shape = 's32[1]{0}', space=sflag, size = 0x4, scoped, tag = 'scoped memory for tpu_custom_call.1']
    #allocation4 [shape = 's32[1]{0}', space=sflag, size = 0x4, scoped, tag = 'scoped memory for tpu_custom_call.1']
    #allocation5 [shape = 'u8[16384]{0}', space=vmem, size = 0x4000, scoped, tag = 'output window, operand 0, single buffered']
    %9 = vsyncpa [#allocation3], 0
    %10 = vsyncpa [#allocation4], 0
    // Predicated region
    $region2: #{tpu_custom_call.1} parent=1 // pred_check
      _
    $region3: #{tpu_custom_call.1} parent=1 // pred_check_branch
      %12 = sbr.rel (0) target = $region5
    $region4: #{tpu_custom_call.1} parent=1 // pred_region
      %s14 = ssub.s32 1024, 1024
      %15 = vsyncadd [#allocation3], %s14
      %s16 = sshll.u32 [#allocation2], 4
      %s17 = int_to_ptr.vmem [resolvable:$true] %s16
      %22 = dma.hbm_to_vmem [thread:$0]  %s0, 1024, %s17, [#allocation3], 256, 256, 16
    $region5: #{tpu_custom_call.1} parent=1 // pred_fallthru
      _
    // Predicated region
    $region6: #{tpu_custom_call.1} parent=1 // pred_check
      _
    $region7: #{tpu_custom_call.1} parent=1 // pred_check_branch
      %24 = sbr.rel (0) target = $region9
    $region8: #{tpu_custom_call.1} parent=1 // pred_region
      _
    $region9: #{tpu_custom_call.1} parent=1 // pred_fallthru
      _
    // Predicated region
    $region10: #{tpu_custom_call.1} parent=1 // pred_check
      _
    $region11: #{tpu_custom_call.1} parent=1 // pred_check_branch
      %26 = sbr.rel (0) target = $region13
    $region12: #{tpu_custom_call.1} parent=1 // pred_region
      _
    $region13: #{tpu_custom_call.1} parent=1 // pred_fallthru
      _
    // Predicated region
    $region14: #{tpu_custom_call.1} parent=1 // pred_check
      _
    $region15: #{tpu_custom_call.1} parent=1 // pred_check_branch
      %28 = sbr.rel (0) target = $region17
    $region16: #{tpu_custom_call.1} parent=1 // pred_region
      _
    $region17: #{tpu_custom_call.1} parent=1 // pred_fallthru
      _
    // Predicated region
    $region18: #{tpu_custom_call.1} parent=1 // pred_check
      _
    $region19: #{tpu_custom_call.1} parent=1 // pred_check_branch
      %30 = sbr.rel (0) target = $region21
    $region20: #{tpu_custom_call.1} parent=1 // pred_region
      %31 = dma.done [#allocation3], 1024
    $region21: #{tpu_custom_call.1} parent=1 // pred_fallthru
      _
    %v33 = vld [vmem:[%s1] sm:$0xf]
    %v34 = vld [vmem:[%s1 + $0x4] sm:$0xf]
    %v35 = vld [vmem:[#allocation2] sm:$0xff]
    %v36 = vld [vmem:[#allocation2 + $0x8] sm:$0xff]
    %v37 = vld [vmem:[#allocation2 + $0x10] sm:$0xff]
    %v38 = vld [vmem:[#allocation2 + $0x18] sm:$0xff]
    %v39 = vld [vmem:[#allocation2 + $0x20] sm:$0xff]
    %v40 = vld [vmem:[#allocation2 + $0x28] sm:$0xff]
    %v41 = vld [vmem:[#allocation2 + $0x30] sm:$0xff]
    %v42 = vld [vmem:[#allocation2 + $0x38] sm:$0xff]
    %v45 = vunpack.c.l.b16 %v33
    %v46 = vunpack.c.l.b16 %v34
    %v47 = vpack.c.b16 %v46, %v45
    %v56 = vunpack.c.l.b16 %v35
    %v57 = vunpack.c.h.b16 %v35
    %v58 = vunpack.c.l.b16 %v36
    %v59 = vunpack.c.h.b16 %v36
    %v60 = vunpack.c.l.b16 %v37
    %v61 = vunpack.c.h.b16 %v37
    %v62 = vunpack.c.l.b16 %v38
    %v63 = vunpack.c.h.b16 %v38
    %v64 = vunpack.c.l.b16 %v39
    %v65 = vunpack.c.h.b16 %v39
    %v66 = vunpack.c.l.b16 %v40
    %v67 = vunpack.c.h.b16 %v40
    %v68 = vunpack.c.l.b16 %v41
    %v69 = vunpack.c.h.b16 %v41
    %v70 = vunpack.c.l.b16 %v42
    %v71 = vunpack.c.h.b16 %v42
    %v72 = vpack.c.b16 %v60, %v56
    %v73 = vpack.c.b16 %v61, %v57
    %v74 = vpack.c.b16 %v62, %v58
    %v75 = vpack.c.b16 %v63, %v59
    %v76 = vpack.c.b16 %v68, %v64
    %v77 = vpack.c.b16 %v69, %v65
    %v78 = vpack.c.b16 %v70, %v66
    %v79 = vpack.c.b16 %v71, %v67
    %vm88 = vcmask 261120
    %v90 = vsel %vm88, %v47, 0
    %92 = vmatprep.subr.bf16.mxu0 0
    %93 = vmatpush1.bf16.msra.mxu0 0
    %94 = vmatprep.subr.bf16.mxu0 0
    %95 = vmatpush1.bf16.msra.mxu0 0
    %96 = vmatprep.subr.bf16.mxu0 0
    %97 = vmatpush1.bf16.msra.mxu0 0
    %98 = vmatprep.subr.bf16.mxu0 0
    %99 = vmatpush1.bf16.msra.mxu0 0
    %100 = vmatprep.subr.bf16.mxu0 0
    %101 = vmatpush1.bf16.msra.mxu0 0
    %102 = vmatprep.subr.bf16.mxu0 0
    %103 = vmatpush1.bf16.msra.mxu0 0
    %104 = vmatprep.subr.bf16.mxu0 %v77
    %105 = vmatpush1.bf16.msra.mxu0 %v76
    %106 = vmatprep.subr.bf16.mxu0 %v73
    %107 = vmatpush1.bf16.msra.mxu0 %v72
    %108 = vmatprep.subr.bf16.mxu0 0
    %109 = vmatpush2.bf16.msra.mxu0 0
    %110 = vmatprep.subr.bf16.mxu0 0
    %111 = vmatpush2.bf16.msra.mxu0 0
    %112 = vmatprep.subr.bf16.mxu0 0
    %113 = vmatpush2.bf16.msra.mxu0 0
    %114 = vmatprep.subr.bf16.mxu0 0
    %115 = vmatpush2.bf16.msra.mxu0 0
    %116 = vmatprep.subr.bf16.mxu0 0
    %117 = vmatpush2.bf16.msra.mxu0 0
    %118 = vmatprep.subr.bf16.mxu0 0
    %119 = vmatpush2.bf16.msra.mxu0 0
    %120 = vmatprep.subr.bf16.mxu0 0
    %121 = vmatpush2.bf16.msra.mxu0 0
    %122 = vmatprep.subr.bf16.mxu0 0
    %123 = vmatpush2.bf16.msra.mxu0 0
    %124 = vmatprep.mubr.bf16.mxu0 0
    %125 = vmatmul.mubr.bf16.gmra.mxu0 %v90
    %v126 = vpop.f32.mrf.mxu0
    %v127 = vadd.f32 0.0, %v126
    %v128 = vpop.f32.mrf.mxu0
    %v129 = vadd.f32 0.0, %v128
    %v130 = vpop.f32.mrf.mxu0
    %v131 = vadd.f32 0.0, %v130
    %v132 = vpop.f32.mrf.mxu0
    %v133 = vadd.f32 0.0, %v132
    %134 = vdwg.mxu0
    %135 = vmatprep.subr.bf16.mxu0 0
    %136 = vmatpush1.bf16.msra.mxu0 0
    %137 = vmatprep.subr.bf16.mxu0 0
    %138 = vmatpush1.bf16.msra.mxu0 0
    %139 = vmatprep.subr.bf16.mxu0 0
    %140 = vmatpush1.bf16.msra.mxu0 0
    %141 = vmatprep.subr.bf16.mxu0 0
    %142 = vmatpush1.bf16.msra.mxu0 0
    %143 = vmatprep.subr.bf16.mxu0 0
    %144 = vmatpush1.bf16.msra.mxu0 0
    %145 = vmatprep.subr.bf16.mxu0 0
    %146 = vmatpush1.bf16.msra.mxu0 0
    %147 = vmatprep.subr.bf16.mxu0 %v79
    %148 = vmatpush1.bf16.msra.mxu0 %v78
    %149 = vmatprep.subr.bf16.mxu0 %v75
    %150 = vmatpush1.bf16.msra.mxu0 %v74
    %151 = vmatprep.subr.bf16.mxu0 0
    %152 = vmatpush2.bf16.msra.mxu0 0
    %153 = vmatprep.subr.bf16.mxu0 0
    %154 = vmatpush2.bf16.msra.mxu0 0
    %155 = vmatprep.subr.bf16.mxu0 0
    %156 = vmatpush2.bf16.msra.mxu0 0
    %157 = vmatprep.subr.bf16.mxu0 0
    %158 = vmatpush2.bf16.msra.mxu0 0
    %159 = vmatprep.subr.bf16.mxu0 0
    %160 = vmatpush2.bf16.msra.mxu0 0
    %161 = vmatprep.subr.bf16.mxu0 0
    %162 = vmatpush2.bf16.msra.mxu0 0
    %163 = vmatprep.subr.bf16.mxu0 0
    %164 = vmatpush2.bf16.msra.mxu0 0
    %165 = vmatprep.subr.bf16.mxu0 0
    %166 = vmatpush2.bf16.msra.mxu0 0
    %167 = vmatprep.mubr.bf16.mxu0 0
    %168 = vmatmul.mubr.bf16.gmra.mxu0 %v90
    %v169 = vpop.f32.mrf.mxu0
    %v170 = vadd.f32 0.0, %v169
    %v171 = vpop.f32.mrf.mxu0
    %v172 = vadd.f32 0.0, %v171
    %v173 = vpop.f32.mrf.mxu0
    %v174 = vadd.f32 0.0, %v173
    %v175 = vpop.f32.mrf.mxu0
    %v176 = vadd.f32 0.0, %v175
    %177 = vdwg.mxu0
    %v178 = vadd.f32 %v127, %v129
    %v179 = vadd.f32 %v178, %v170
    %v180 = vadd.f32 %v179, %v172
    %181 = vadd.xlane.f32.xlu0 %v180
    %v182 = vpop.xlane.xlu0 %181
    %v183 = vadd.f32 %v131, %v133
    %v184 = vadd.f32 %v183, %v174
    %v185 = vadd.f32 %v184, %v176
    %186 = vadd.xlane.f32.xlu0 %v185
    %v187 = vpop.xlane.xlu0 %186
    %v188 = vmul.f32 %v127, %v127
    %v189 = vmul.f32 %v129, %v129
    %v190 = vmul.f32 %v170, %v170
    %v191 = vmul.f32 %v172, %v172
    %v192 = vmul.f32 %v131, %v131
    %v193 = vmul.f32 %v133, %v133
    %v194 = vmul.f32 %v174, %v174
    %v195 = vmul.f32 %v176, %v176
    %v196 = vadd.f32 %v188, %v189
    %v197 = vadd.f32 %v196, %v190
    %v198 = vadd.f32 %v197, %v191
    %199 = vadd.xlane.f32.xlu0 %v198
    %v200 = vpop.xlane.xlu0 %199
    %v201 = vadd.f32 %v192, %v193
    %v202 = vadd.f32 %v201, %v194
    %v203 = vadd.f32 %v202, %v195
    %204 = vadd.xlane.f32.xlu0 %v203
    %v205 = vpop.xlane.xlu0 %204
    %v206 = vmul.f32 %v182, 0.001953125
    %v207 = vmul.f32 %v187, 0.001953125
    %v208 = vmul.f32 %v200, 0.001953125
    %v209 = vmul.f32 %v205, 0.001953125
    %v210 = vmul.f32 %v206, %v206
    %v211 = vmul.f32 %v207, %v207
    %v212 = vsub.f32 %v208, %v210
    %v213 = vsub.f32 %v209, %v211
    %v214 = vadd.f32 %v212, 1e-05
    %v215 = vadd.f32 %v213, 1e-05
    %v216 = vrsqrt.pop %v214
    %v217 = vrsqrt.pop %v215
    %v218 = vld [vmem:[%s2] sm:$0xff]
    %v219 = vld [vmem:[%s2 + $0x8] sm:$0xff]
    %v220 = vmul.f32 %v216, %v218
    %v221 = vmul.f32 %v217, %v219
    %v222 = vsub.f32 %v127, %v206
    %v223 = vsub.f32 %v129, %v206
    %v224 = vsub.f32 %v170, %v206
    %v225 = vsub.f32 %v172, %v206
    %v226 = vsub.f32 %v131, %v207
    %v227 = vsub.f32 %v133, %v207
    %v228 = vsub.f32 %v174, %v207
    %v229 = vsub.f32 %v176, %v207
    %231 = vset.pattern.permute.xlu0 0
    %232 = vperm.xlu0 %231, %v220
    %v233 = vpop.permute.xlu0 %232
    %236 = vset.pattern.permute.xlu0 0
    %237 = vperm.xlu0 %236, %v221
    %v238 = vpop.permute.xlu0 %237
    %v240 = vmul.f32 %v222, %v233
    %v241 = vmul.f32 %v223, %v233
    %v242 = vmul.f32 %v224, %v233
    %v243 = vmul.f32 %v225, %v233
    %v244 = vmul.f32 %v226, %v238
    %v245 = vmul.f32 %v227, %v238
    %v246 = vmul.f32 %v228, %v238
    %v247 = vmul.f32 %v229, %v238
    %v248 = vld [vmem:[%s3] sm:$0xff]
    %v249 = vld [vmem:[%s3 + $0x8] sm:$0xff]
    %251 = vset.pattern.permute.xlu0 0
    %252 = vperm.xlu0 %251, %v248
    %v253 = vpop.permute.xlu0 %252
    %256 = vset.pattern.permute.xlu0 0
    %257 = vperm.xlu0 %256, %v249
    %v258 = vpop.permute.xlu0 %257
    %v260 = vadd.f32 %v240, %v253
    %v261 = vadd.f32 %v241, %v253
    %v262 = vadd.f32 %v242, %v253
    %v263 = vadd.f32 %v243, %v253
    %v264 = vadd.f32 %v244, %v258
    %v265 = vadd.f32 %v245, %v258
    %v266 = vadd.f32 %v246, %v258
    %v267 = vadd.f32 %v247, %v258
    %v268 = vmax.f32 %v260, 0.0
    %v269 = vmax.f32 %v261, 0.0
    %v270 = vmax.f32 %v262, 0.0
    %v271 = vmax.f32 %v263, 0.0
    %v272 = vmax.f32 %v264, 0.0
    %v273 = vmax.f32 %v265, 0.0
    %v274 = vmax.f32 %v266, 0.0
    %v275 = vmax.f32 %v267, 0.0
    %v276 = vpack.c.bf16 %v272, %v268
    %v277 = vpack.c.bf16 %v273, %v269
    %v278 = vpack.c.bf16 %v274, %v270
    %v279 = vpack.c.bf16 %v275, %v271
    %v284 = vunpack.c.l.b16 %v276
    %v285 = vunpack.c.l.b16 %v277
    %v286 = vunpack.c.l.b16 %v278
    %v287 = vunpack.c.l.b16 %v279
    %v288 = vunpack.c.h.b16 %v276
    %v289 = vunpack.c.h.b16 %v277
    %v290 = vunpack.c.h.b16 %v278
    %v291 = vunpack.c.h.b16 %v279
    %v292 = vpack.c.b16 %v285, %v284
    %v293 = vpack.c.b16 %v287, %v286
    %v294 = vpack.c.b16 %v289, %v288
    %v295 = vpack.c.b16 %v291, %v290
    %300 = vst [vmem:[#allocation5] sm:$0xff] %v292
    %301 = vst [vmem:[#allocation5 + $0x8] sm:$0xff] %v293
    %302 = vst [vmem:[#allocation5 + $0x10] sm:$0xff] %v294
    %303 = vst [vmem:[#allocation5 + $0x18] sm:$0xff] %v295
    // Predicated region
    $region22: #{tpu_custom_call.1} parent=1 // pred_check
      _
    $region23: #{tpu_custom_call.1} parent=1 // pred_check_branch
      %305 = sbr.rel (0) target = $region25
    $region24: #{tpu_custom_call.1} parent=1 // pred_region
      %s307 = ssub.s32 512, 512
      %308 = vsyncadd [#allocation4], %s307
      %s309 = sshll.u32 [#allocation5], 4
      %s310 = int_to_ptr.vmem [resolvable:$true] %s309
      %315 = dma.vmem_to_hbm [thread:$0]  %s310, 512, %s4, [#allocation4], 256, 256, 16
    $region25: #{tpu_custom_call.1} parent=1 // pred_fallthru
      _
    // Predicated region
    $region26: #{tpu_custom_call.1} parent=1 // pred_check
      _
    $region27: #{tpu_custom_call.1} parent=1 // pred_check_branch
      %317 = sbr.rel (0) target = $region29
    $region28: #{tpu_custom_call.1} parent=1 // pred_region
      %318 = dma.done [#allocation4], 512
    $region29: #{tpu_custom_call.1} parent=1 // pred_fallthru
      _
    %319 = vsyncpa [#allocation3], 1
    %320 = vsyncpa [#allocation4], 1

</llo_original>
